<compile_context>
chip_gen: v5e
topology: v5e:2x2
jax: 0.10.0
libtpu: 0.0.40
codegen_flags: <defaults>
</compile_context>

<pallas_src>
import jax
import jax.numpy as jnp
from jax.experimental import pallas as pl
from jax.experimental.pallas import tpu as pltpu


def _fused_two_linear_kernel(x_ref, w1t_ref, w2t_ref, o_ref):
    # Weights arrive pre-transposed to [in, out], so both matmuls are the
    # canonical [M,K]x[K,N] MXU feed. The intermediate `h` never leaves the
    # kernel (stays in vregs / compiler-managed VMEM).
    h = jnp.dot(x_ref[...], w1t_ref[...], preferred_element_type=jnp.float32)
    y = jnp.dot(h, w2t_ref[...], preferred_element_type=jnp.float32)
    o_ref[...] = y.astype(o_ref.dtype)


def _choose_tm(batch, tm_max):
    """Pick an M-tile: multiple of 8, >=2 grid steps, even step count if possible."""
    tm = max(8, min(tm_max, batch))
    tm = (tm // 8) * 8
    # Guarantee at least 2 grid steps so the next x tile prefetches under the
    # current step's matmuls (otherwise all DMA is exposed).
    while tm > 8 and pl.cdiv(batch, tm) < 2:
        tm = max(8, ((tm // 2) // 8) * 8)
    # Prefer an even number of steps so the "parallel" M axis can split across
    # both TensorCores on v7x (no effect on single-TC v5e/v6e).
    if pl.cdiv(batch, tm) % 2 != 0:
        tm_half = max(8, ((tm // 2) // 8) * 8)
        if tm_half < tm and pl.cdiv(batch, tm_half) % 2 == 0:
            tm = tm_half
    return tm


def mod_forward(x, w1, w2, *, tm=128):
    """x: [B, S]; w1, w2: [S, S] in PyTorch [out_features, in_features] layout."""
    B, S = x.shape
    assert w1.shape == (S, S) and w2.shape == (S, S)

    # One-time wrapper-side transpose to [in, out]; removes any per-grid-step
    # relayout of the loop-invariant weights inside the kernel.
    w1t = w1.T
    w2t = w2.T

    tm = _choose_tm(B, tm)
    steps = pl.cdiv(B, tm)
    b_pad = steps * tm
    x_in = x if b_pad == B else jnp.pad(x, ((0, b_pad - B), (0, 0)))
    grid = (steps,)

    itemsize = jnp.dtype(x.dtype).itemsize
    # Single-buffered resident weights + double-buffered x/out tiles.
    weight_bytes = 2 * S * S * itemsize
    tile_bytes = 2 * 2 * tm * S * itemsize
    inter_bytes = tm * S * 4  # f32 intermediate h
    footprint = weight_bytes + tile_bytes + inter_bytes
    vmem_limit = int(min(max(2 * footprint, 32 << 20), 64 << 20))

    cost = pl.CostEstimate(
        flops=4 * b_pad * S * S,                       # two B*S*S matmuls
        bytes_accessed=itemsize * (2 * b_pad * S + 2 * S * S),
        transcendentals=0,
    )

    out = pl.pallas_call(
        _fused_two_linear_kernel,
        out_shape=jax.ShapeDtypeStruct((b_pad, S), x.dtype),
        grid=grid,
        in_specs=[
            # x tile: streamed, default double-buffering for prefetch overlap.
            pl.BlockSpec((tm, S), lambda i: (i, 0)),
            # Weights: constant index_map -> resident in VMEM; single-buffered
            # since the second pipeline buffer would never be used.
            pl.BlockSpec((S, S), lambda i: (0, 0), pipeline_mode=pl.Buffered(1)),
            pl.BlockSpec((S, S), lambda i: (0, 0), pipeline_mode=pl.Buffered(1)),
        ],
        out_specs=pl.BlockSpec((tm, S), lambda i: (i, 0)),
        compiler_params=pltpu.CompilerParams(
            dimension_semantics=("parallel",),  # independent M tiles -> megacore
            vmem_limit_bytes=vmem_limit,
        ),
        cost_estimate=cost,
    )(x_in, w1t, w2t)

    return out if b_pad == B else out[:B]


if __name__ == "__main__":
    # Lane-dense demo sizes: last dim multiple of 128, batch multiple of 8.
    # tm selection yields a 2-step (even) grid for B=128.
    size = 256
    batch = 128

    key = jax.random.PRNGKey(0)
    kx, k1, k2 = jax.random.split(key, 3)

    # Shapes follow nn.Linear(size, size, bias=False): weight is [out, in].
    x = jax.random.normal(kx, (batch, size), dtype=jnp.float32)
    scale = 1.0 / jnp.sqrt(jnp.float32(size))
    w1 = jax.random.normal(k1, (size, size), dtype=jnp.float32) * scale
    w2 = jax.random.normal(k2, (size, size), dtype=jnp.float32) * scale

    out = mod_forward(x, w1, w2)
    out = jax.block_until_ready(out)

    # Reference of the PyTorch semantics: linear2(linear1(x)).
    ref = (x @ w1.T) @ w2.T
    assert out.shape == (batch, size)
    assert jnp.allclose(out, ref, atol=1e-4, rtol=1e-4)

    print("KERNEL_OK")
</pallas_src>

<mosaic_0001>
module attributes {stable_mosaic.version = 11 : i64} {
  func.func @_fused_two_linear_kernel(%arg0: i32, %arg1: memref<64x256xf32, #tpu.memory_space<vmem>>, %arg2: memref<256x256xf32, #tpu.memory_space<vmem>>, %arg3: memref<256x256xf32, #tpu.memory_space<vmem>>, %arg4: memref<64x256xf32, #tpu.memory_space<vmem>>) attributes {dimension_semantics = [#tpu.dimension_semantics<parallel>], iteration_bounds = array<i64: 2>, scalar_prefetch = 0 : i64, scratch_operands = 0 : i64, tpu.core_type = #tpu.core_type<tc>, window_params = [{transform_indices = @transform_0, window_bounds = array<i64: 64, 256>}, {pipeline_mode = #tpu.pipeline_mode<synchronous>, transform_indices = @transform_1, window_bounds = array<i64: 256, 256>}, {pipeline_mode = #tpu.pipeline_mode<synchronous>, transform_indices = @transform_2, window_bounds = array<i64: 256, 256>}, {transform_indices = @transform_3, window_bounds = array<i64: 64, 256>}]} {
    %c0 = arith.constant 0 : index
    %c0_0 = arith.constant 0 : index
    %0 = vector.load %arg1[%c0, %c0_0] : memref<64x256xf32, #tpu.memory_space<vmem>>, vector<64x256xf32>
    %c0_1 = arith.constant 0 : index
    %c0_2 = arith.constant 0 : index
    %1 = vector.load %arg2[%c0_1, %c0_2] : memref<256x256xf32, #tpu.memory_space<vmem>>, vector<256x256xf32>
    %cst = arith.constant dense<0.000000e+00> : vector<64x256xf32>
    %2 = tpu.matmul %0, %1, %cst {dimension_numbers = #tpu.dot_dimension_numbers<[1], [0], [0], [1], [0, 0, 1, 1], [], []>} : vector<64x256xf32>, vector<256x256xf32>, vector<64x256xf32> -> vector<64x256xf32>
    %c0_3 = arith.constant 0 : index
    %c0_4 = arith.constant 0 : index
    %3 = vector.load %arg3[%c0_3, %c0_4] : memref<256x256xf32, #tpu.memory_space<vmem>>, vector<256x256xf32>
    %cst_5 = arith.constant dense<0.000000e+00> : vector<64x256xf32>
    %4 = tpu.matmul %2, %3, %cst_5 {dimension_numbers = #tpu.dot_dimension_numbers<[1], [0], [0], [1], [0, 0, 1, 1], [], []>} : vector<64x256xf32>, vector<256x256xf32>, vector<64x256xf32> -> vector<64x256xf32>
    %c0_6 = arith.constant 0 : index
    %c0_7 = arith.constant 0 : index
    %5 = vector.load %arg4[%c0_6, %c0_7] : memref<64x256xf32, #tpu.memory_space<vmem>>, vector<64x256xf32>
    tpu.vector_store %arg4[%c0_6, %c0_7], %4 {strides = array<i32>} : memref<64x256xf32, #tpu.memory_space<vmem>>, vector<64x256xf32>,
    return
  }
  func.func @transform_0(%arg0: i32) -> (i32, i32) {
    %c0_i32 = arith.constant 0 : i32
    %c0_i32_0 = arith.constant 0 : i32
    return %arg0, %c0_i32 : i32, i32
  }
  func.func @transform_1(%arg0: i32) -> (i32, i32) {
    %c0_i32 = arith.constant 0 : i32
    %c0_i32_0 = arith.constant 0 : i32
    %c0_i32_1 = arith.constant 0 : i32
    return %c0_i32, %c0_i32_0 : i32, i32
  }
  func.func @transform_2(%arg0: i32) -> (i32, i32) {
    %c0_i32 = arith.constant 0 : i32
    %c0_i32_0 = arith.constant 0 : i32
    %c0_i32_1 = arith.constant 0 : i32
    return %c0_i32, %c0_i32_0 : i32, i32
  }
  func.func @transform_3(%arg0: i32) -> (i32, i32) {
    %c0_i32 = arith.constant 0 : i32
    %c0_i32_0 = arith.constant 0 : i32
    return %arg0, %c0_i32 : i32, i32
  }
}

</mosaic_0001>

<llo_original>
// kernel: tpu_custom_call.1
$region0: #{tpu_custom_call.1}
  #allocation0 [shape = 'u32[]', space=smem, size = 0x4, offset = 0x4, fixed_abs, tag = 'smem constant byte address 0x4 - core index']
  #allocation1 [shape = 'u32[72,128]{1,0:T(1,128)}', space=vmem, size = 0x9000, scoped, tag = 'internal scratch']
  %s0 = inlined_call_operand.hbm [shape: f32[128,256], index: 0, kind: input, shape index: {}]
  %s1 = inlined_call_operand.hbm [shape: f32[256,256], index: 1, kind: input, shape index: {}]
  %s2 = inlined_call_operand.hbm [shape: f32[256,256], index: 2, kind: input, shape index: {}]
  %s3 = inlined_call_operand.hbm [shape: f32[128,256], index: 3, kind: output, shape index: {}]
  %s4 = sld [smem:[#allocation0]]
  $region57: #{tpu_custom_call.1} parent=0
    _
  %s6 = ssub.s32 1, %s4
  %s7 = scalar_select 0, %s6, %s4
  $region1: #{tpu_custom_call.1} parent=0
    #allocation2 [shape = 'u8[131072]{0}', space=vmem, size = 0x20000, scoped, tag = 'input window, operand 0']
    #allocation3 [shape = 's32[2]{0}', space=sflag, size = 0x8, scoped, tag = 'scoped memory for tpu_custom_call.1']
    #allocation4 [shape = 's32[2]{0}', space=sflag, size = 0x8, scoped, tag = 'scoped memory for tpu_custom_call.1']
    #allocation5 [shape = 'u8[262144]{0}', space=vmem, size = 0x40000, scoped, tag = 'input window, operand 1, single buffered']
    #allocation6 [shape = 's32[1]{0}', space=sflag, size = 0x4, scoped, tag = 'scoped memory for tpu_custom_call.1']
    #allocation7 [shape = 'u8[262144]{0}', space=vmem, size = 0x40000, scoped, tag = 'input window, operand 2, single buffered']
    #allocation8 [shape = 'u8[131072]{0}', space=vmem, size = 0x20000, scoped, tag = 'output window, operand 0']
    %8 = vsyncpa [#allocation3], 0
    %s9 = scalar_lea.sflag [#allocation3], 1
    %10 = vsyncpa %s9, 0
    %11 = vsyncpa [#allocation6], 0
    %12 = vsyncpa [#allocation4], 0
    %s13 = scalar_lea.sflag [#allocation4], 1
    %14 = vsyncpa %s13, 0
    loop: start=0, step=1, limit=4
    $region2: #{tpu_custom_call.1} parent=1 // loop_pre_header
      _
    $region3: #{tpu_custom_call.1} parent=1 // loop_header
      %s16 = sphi 0, %s20
      %p17 = scmp.ge.s32.totalorder %s16, 4
      %s26 = sphi 0, %s28
      %s29 = sphi 0, %s26
      %s30 = sphi 0, %s29
      %s46 = sphi 0, %s30
      %s50 = sphi 0, %s50
      %s52 = sphi 0, %s50
      %s53 = sphi 0, %s52
      %s67 = sphi 0, %s53
      %s71 = sphi 0, %s71
      %s73 = sphi 0, %s71
      %s74 = sphi 0, %s73
      %s88 = sphi 0, %s74
      %s94 = sphi 0, %s96
      %s97 = sphi 0, %s94
      %s98 = sphi 0, %s97
      %s114 = sphi 0, %s98
    $region4: #{tpu_custom_call.1} parent=1 // loop_header_branch
      %19 = sbr.rel (%p17) target = $region8
    $region5: #{tpu_custom_call.1} parent=1 // loop_body
      %s21 = ssub.s32 %s16, 1
      %s22 = ssub.s32 %s16, 2
      %s23 = sadd.s32 %s16, 1
      %s24 = ssub.s32 %s16, %s23
      %p25 = scmp.eq.s32.totalorder %s24, 0
      %s27 = sadd.s32 %s26, 1
      %s28 = scalar_select %p25, %s26, %s27
      %p31 = pneg %p25
      %p32 = scmp.eq.s32.totalorder %s16, 1
      %p33 = por %p31, %p32
      %p34 = scmp.ne.s32.totalorder %s26, %s29
      %p35 = scmp.eq.s32.totalorder %s16, 0
      %p36 = por %p34, %p35
      %p37 = scmp.ne.s32.totalorder %s26, %s29
      %p38 = scmp.eq.s32.totalorder %s21, 1
      %p39 = por %p37, %p38
      %p40 = scmp.ne.s32.totalorder %s29, %s30
      %p41 = scmp.eq.s32.totalorder %s21, 0
      %p42 = por %p40, %p41
      %p43 = scmp.ne.s32.totalorder %s29, %s30
      %p44 = scmp.eq.s32.totalorder %s22, 1
      %p45 = por %p43, %p44
      %p47 = scmp.ne.s32.totalorder %s30, %s46
      %p48 = scmp.eq.s32.totalorder %s22, 0
      %p49 = por %p47, %p48
      %s51 = sadd.s32 %s50, 1
      %p54 = scmp.eq.s32.totalorder %s16, 1
      %p55 = scmp.ne.s32.totalorder %s50, %s52
      %p56 = scmp.eq.s32.totalorder %s16, 0
      %p57 = por %p55, %p56
      %p58 = scmp.ne.s32.totalorder %s50, %s52
      %p59 = scmp.eq.s32.totalorder %s21, 1
      %p60 = por %p58, %p59
      %p61 = scmp.ne.s32.totalorder %s52, %s53
      %p62 = scmp.eq.s32.totalorder %s21, 0
      %p63 = por %p61, %p62
      %p64 = scmp.ne.s32.totalorder %s52, %s53
      %p65 = scmp.eq.s32.totalorder %s22, 1
      %p66 = por %p64, %p65
      %p68 = scmp.ne.s32.totalorder %s53, %s67
      %p69 = scmp.eq.s32.totalorder %s22, 0
      %p70 = por %p68, %p69
      %s72 = sadd.s32 %s71, 1
      %p75 = scmp.eq.s32.totalorder %s16, 1
      %p76 = scmp.ne.s32.totalorder %s71, %s73
      %p77 = scmp.eq.s32.totalorder %s16, 0
      %p78 = por %p76, %p77
      %p79 = scmp.ne.s32.totalorder %s71, %s73
      %p80 = scmp.eq.s32.totalorder %s21, 1
      %p81 = por %p79, %p80
      %p82 = scmp.ne.s32.totalorder %s73, %s74
      %p83 = scmp.eq.s32.totalorder %s21, 0
      %p84 = por %p82, %p83
      %p85 = scmp.ne.s32.totalorder %s73, %s74
      %p86 = scmp.eq.s32.totalorder %s22, 1
      %p87 = por %p85, %p86
      %p89 = scmp.ne.s32.totalorder %s74, %s88
      %p90 = scmp.eq.s32.totalorder %s22, 0
      %p91 = por %p89, %p90
      %s92 = ssub.s32 %s16, %s23
      %p93 = scmp.eq.s32.totalorder %s92, 0
      %s95 = sadd.s32 %s94, 1
      %s96 = scalar_select %p93, %s94, %s95
      %p99 = pneg %p93
      %p100 = scmp.eq.s32.totalorder %s16, 1
      %p101 = por %p99, %p100
      %p102 = scmp.ne.s32.totalorder %s94, %s97
      %p103 = scmp.eq.s32.totalorder %s16, 0
      %p104 = por %p102, %p103
      %p105 = scmp.ne.s32.totalorder %s94, %s97
      %p106 = scmp.eq.s32.totalorder %s21, 1
      %p107 = por %p105, %p106
      %p108 = scmp.ne.s32.totalorder %s97, %s98
      %p109 = scmp.eq.s32.totalorder %s21, 0
      %p110 = por %p108, %p109
      %p111 = scmp.ne.s32.totalorder %s97, %s98
      %p112 = scmp.eq.s32.totalorder %s22, 1
      %p113 = por %p111, %p112
      %p115 = scmp.ne.s32.totalorder %s98, %s114
      %p116 = scmp.eq.s32.totalorder %s22, 0
      %p117 = por %p115, %p116
      %p118 = scmp.le.s32.totalorder 1, %s16
      %p119 = scmp.lt.s32.totalorder %s16, 3
      %p120 = pnand %p118, %p119
      %p121 = pneg %p120
      // Predicated region
      $region9: #{tpu_custom_call.1} parent=5 // pred_check
        _
      $region10: #{tpu_custom_call.1} parent=5 // pred_check_branch
        %123 = sbr.rel (%p120) target = $region12
      $region11: #{tpu_custom_call.1} parent=5 // pred_region
        %s124 = ssub.s32 %s16, 1
        // Predicated region
        $region13: #{tpu_custom_call.1} parent=11 // pred_check
          %p125 = pneg %p63
        $region14: #{tpu_custom_call.1} parent=11 // pred_check_branch
          %127 = sbr.rel (%p125) target = $region16
        $region15: #{tpu_custom_call.1} parent=11 // pred_region
          %129 = vsyncadd [#allocation6], 0
          %s130 = sshll.u32 %s1, 4
          %s131 = int_to_ptr.hbm [resolvable:$true] %s130
          %s132 = sshll.u32 [#allocation5], 4
          %s133 = int_to_ptr.vmem [resolvable:$true] %s132
          %138 = dma.hbm_to_vmem [thread:$0]  %s131, 8192, %s133, [#allocation6], 256, 256, 16
        $region16: #{tpu_custom_call.1} parent=11 // pred_fallthru
          _
        // Predicated region
        $region17: #{tpu_custom_call.1} parent=11 // pred_check
          %p139 = pneg %p84
        $region18: #{tpu_custom_call.1} parent=11 // pred_check_branch
          %141 = sbr.rel (%p139) target = $region20
        $region19: #{tpu_custom_call.1} parent=11 // pred_region
          %143 = vsyncadd [#allocation6], 0
          %s144 = sshll.u32 %s2, 4
          %s145 = int_to_ptr.hbm [resolvable:$true] %s144
          %s146 = sshll.u32 [#allocation7], 4
          %s147 = int_to_ptr.vmem [resolvable:$true] %s146
          %152 = dma.hbm_to_vmem [thread:$0]  %s145, 8192, %s147, [#allocation6], 256, 256, 16
        $region20: #{tpu_custom_call.1} parent=11 // pred_fallthru
          _
      $region12: #{tpu_custom_call.1} parent=5 // pred_fallthru
        _
      %p153 = scmp.lt.s32.totalorder %s16, 2
      // Predicated region
      $region21: #{tpu_custom_call.1} parent=5 // pred_check
        %p154 = pneg %p153
      $region22: #{tpu_custom_call.1} parent=5 // pred_check_branch
        %156 = sbr.rel (%p154) target = $region24
      $region23: #{tpu_custom_call.1} parent=5 // pred_region
        // Predicated region
        $region25: #{tpu_custom_call.1} parent=23 // pred_check
          %p157 = pneg %p36
        $region26: #{tpu_custom_call.1} parent=23 // pred_check_branch
          %159 = sbr.rel (%p157) target = $region28
        $region27: #{tpu_custom_call.1} parent=23 // pred_region
          %s160 = sand.u32 %s26, 1
          %s161 = scalar_lea.sflag [#allocation3], %s160
          %s162 = sand.u32 %s26, 1
          %s163 = smul.addr %s162, 128
          %s164 = scalar_lea.vmem [#allocation2], %s163
          %s165 = smul.u32 8, %s16
          %167 = vsyncadd %s161, 0
          %s168 = smul.addr %s165, 2
          %s169 = smul.addr %s168, 8
          %s170 = scalar_lea.hbm %s0, %s169
          %s171 = sshll.u32 %s170, 4
          %s172 = int_to_ptr.hbm [resolvable:$true] %s171
          %s173 = sshll.u32 %s164, 4
          %s174 = int_to_ptr.vmem [resolvable:$true] %s173
          %179 = dma.hbm_to_vmem [thread:$0]  %s172, 2048, %s174, %s161, 256, 256, 16
        $region28: #{tpu_custom_call.1} parent=23 // pred_fallthru
          _
      $region24: #{tpu_custom_call.1} parent=5 // pred_fallthru
        _
      %p180 = scmp.le.s32.totalorder 1, %s16
      %p181 = scmp.lt.s32.totalorder %s16, 3
      %p182 = pnand %p180, %p181
      %p183 = pneg %p182
      // Predicated region
      $region29: #{tpu_custom_call.1} parent=5 // pred_check
        _
      $region30: #{tpu_custom_call.1} parent=5 // pred_check_branch
        %185 = sbr.rel (%p182) target = $region32
      $region31: #{tpu_custom_call.1} parent=5 // pred_region
        %s186 = ssub.s32 %s16, 1
        %s187 = sand.u32 %s29, 1
        %s188 = scalar_lea.sflag [#allocation3], %s187
        %s189 = sand.u32 %s29, 1
        %s190 = smul.addr %s189, 128
        %s191 = scalar_lea.vmem [#allocation2], %s190
        // Predicated region
        $region33: #{tpu_custom_call.1} parent=31 // pred_check
          %p192 = pneg %p42
        $region34: #{tpu_custom_call.1} parent=31 // pred_check_branch
          %194 = sbr.rel (%p192) target = $region36
        $region35: #{tpu_custom_call.1} parent=31 // pred_region
          %196 = dma.done %s188, 2048
        $region36: #{tpu_custom_call.1} parent=31 // pred_fallthru
          _
        // Predicated region
        $region37: #{tpu_custom_call.1} parent=31 // pred_check
          %p197 = pneg %p63
        $region38: #{tpu_custom_call.1} parent=31 // pred_check_branch
          %199 = sbr.rel (%p197) target = $region40
        $region39: #{tpu_custom_call.1} parent=31 // pred_region
          %201 = dma.done [#allocation6], 8192
        $region40: #{tpu_custom_call.1} parent=31 // pred_fallthru
          _
        // Predicated region
        $region41: #{tpu_custom_call.1} parent=31 // pred_check
          %p202 = pneg %p84
        $region42: #{tpu_custom_call.1} parent=31 // pred_check_branch
          %204 = sbr.rel (%p202) target = $region44
        $region43: #{tpu_custom_call.1} parent=31 // pred_region
          %206 = dma.done [#allocation6], 8192
        $region44: #{tpu_custom_call.1} parent=31 // pred_fallthru
          _
        %s207 = sand.u32 %s29, 1
        %s208 = scalar_lea.sflag [#allocation3], %s207
        %s209 = sand.u32 %s29, 1
        %s210 = smul.addr %s209, 128
        %s211 = scalar_lea.vmem [#allocation2], %s210
        %p212 = pneg %p42
        %p213 = pneg %p39
        %p214 = pneg %p63
        %p215 = pneg %p60
        %p216 = pneg %p84
        %p217 = pneg %p81
        %p218 = pneg %p110
        %p219 = pneg %p107
        %s220 = sand.u32 %s97, 1
        %s221 = scalar_lea.sflag [#allocation4], %s220
        %s222 = sand.u32 %s97, 1
        %s223 = smul.addr %s222, 128
        %s224 = scalar_lea.vmem [#allocation8], %s223
        %s225 = smul.u32 8, %s21
        %s226 = smul.u32 8, %s21
        %v227 = vld [vmem:[%s191] sm:$0xff]
        %v228 = vld [vmem:[%s191 + $0x8] sm:$0xff]
        %v229 = vld [vmem:[%s191 + $0x10] sm:$0xff]
        %v230 = vld [vmem:[%s191 + $0x18] sm:$0xff]
        %v231 = vld [vmem:[%s191 + $0x20] sm:$0xff]
        %v232 = vld [vmem:[%s191 + $0x28] sm:$0xff]
        %v233 = vld [vmem:[%s191 + $0x30] sm:$0xff]
        %v234 = vld [vmem:[%s191 + $0x38] sm:$0xff]
        %v235 = vld [vmem:[%s191 + $0x40] sm:$0xff]
        %v236 = vld [vmem:[%s191 + $0x48] sm:$0xff]
        %v237 = vld [vmem:[%s191 + $0x50] sm:$0xff]
        %v238 = vld [vmem:[%s191 + $0x58] sm:$0xff]
        %v239 = vld [vmem:[%s191 + $0x60] sm:$0xff]
        %v240 = vld [vmem:[%s191 + $0x68] sm:$0xff]
        %v241 = vld [vmem:[%s191 + $0x70] sm:$0xff]
        %v242 = vld [vmem:[%s191 + $0x78] sm:$0xff]
        %v243 = vld [vmem:[#allocation5] sm:$0xff]
        %v244 = vld [vmem:[#allocation5 + $0x8] sm:$0xff]
        %v245 = vld [vmem:[#allocation5 + $0x10] sm:$0xff]
        %v246 = vld [vmem:[#allocation5 + $0x18] sm:$0xff]
        %v247 = vld [vmem:[#allocation5 + $0x20] sm:$0xff]
        %v248 = vld [vmem:[#allocation5 + $0x28] sm:$0xff]
        %v249 = vld [vmem:[#allocation5 + $0x30] sm:$0xff]
        %v250 = vld [vmem:[#allocation5 + $0x38] sm:$0xff]
        %v251 = vld [vmem:[#allocation5 + $0x40] sm:$0xff]
        %v252 = vld [vmem:[#allocation5 + $0x48] sm:$0xff]
        %v253 = vld [vmem:[#allocation5 + $0x50] sm:$0xff]
        %v254 = vld [vmem:[#allocation5 + $0x58] sm:$0xff]
        %v255 = vld [vmem:[#allocation5 + $0x60] sm:$0xff]
        %v256 = vld [vmem:[#allocation5 + $0x68] sm:$0xff]
        %v257 = vld [vmem:[#allocation5 + $0x70] sm:$0xff]
        %v258 = vld [vmem:[#allocation5 + $0x78] sm:$0xff]
        %v259 = vld [vmem:[#allocation5 + $0x80] sm:$0xff]
        %v260 = vld [vmem:[#allocation5 + $0x88] sm:$0xff]
        %v261 = vld [vmem:[#allocation5 + $0x90] sm:$0xff]
        %v262 = vld [vmem:[#allocation5 + $0x98] sm:$0xff]
        %v263 = vld [vmem:[#allocation5 + $0xa0] sm:$0xff]
        %v264 = vld [vmem:[#allocation5 + $0xa8] sm:$0xff]
        %v265 = vld [vmem:[#allocation5 + $0xb0] sm:$0xff]
        %v266 = vld [vmem:[#allocation5 + $0xb8] sm:$0xff]
        %v267 = vld [vmem:[#allocation5 + $0xc0] sm:$0xff]
        %v268 = vld [vmem:[#allocation5 + $0xc8] sm:$0xff]
        %v269 = vld [vmem:[#allocation5 + $0xd0] sm:$0xff]
        %v270 = vld [vmem:[#allocation5 + $0xd8] sm:$0xff]
        %v271 = vld [vmem:[#allocation5 + $0xe0] sm:$0xff]
        %v272 = vld [vmem:[#allocation5 + $0xe8] sm:$0xff]
        %v273 = vld [vmem:[#allocation5 + $0xf0] sm:$0xff]
        %v274 = vld [vmem:[#allocation5 + $0xf8] sm:$0xff]
        %v275 = vld [vmem:[#allocation5 + $0x100] sm:$0xff]
        %v276 = vld [vmem:[#allocation5 + $0x108] sm:$0xff]
        %v277 = vld [vmem:[#allocation5 + $0x110] sm:$0xff]
        %v278 = vld [vmem:[#allocation5 + $0x118] sm:$0xff]
        %v279 = vld [vmem:[#allocation5 + $0x120] sm:$0xff]
        %v280 = vld [vmem:[#allocation5 + $0x128] sm:$0xff]
        %v281 = vld [vmem:[#allocation5 + $0x130] sm:$0xff]
        %v282 = vld [vmem:[#allocation5 + $0x138] sm:$0xff]
        %v283 = vld [vmem:[#allocation5 + $0x140] sm:$0xff]
        %v284 = vld [vmem:[#allocation5 + $0x148] sm:$0xff]
        %v285 = vld [vmem:[#allocation5 + $0x150] sm:$0xff]
        %v286 = vld [vmem:[#allocation5 + $0x158] sm:$0xff]
        %v287 = vld [vmem:[#allocation5 + $0x160] sm:$0xff]
        %v288 = vld [vmem:[#allocation5 + $0x168] sm:$0xff]
        %v289 = vld [vmem:[#allocation5 + $0x170] sm:$0xff]
        %v290 = vld [vmem:[#allocation5 + $0x178] sm:$0xff]
        %v291 = vld [vmem:[#allocation5 + $0x180] sm:$0xff]
        %v292 = vld [vmem:[#allocation5 + $0x188] sm:$0xff]
        %v293 = vld [vmem:[#allocation5 + $0x190] sm:$0xff]
        %v294 = vld [vmem:[#allocation5 + $0x198] sm:$0xff]
        %v295 = vld [vmem:[#allocation5 + $0x1a0] sm:$0xff]
        %v296 = vld [vmem:[#allocation5 + $0x1a8] sm:$0xff]
        %v297 = vld [vmem:[#allocation5 + $0x1b0] sm:$0xff]
        %v298 = vld [vmem:[#allocation5 + $0x1b8] sm:$0xff]
        %v299 = vld [vmem:[#allocation5 + $0x1c0] sm:$0xff]
        %v300 = vld [vmem:[#allocation5 + $0x1c8] sm:$0xff]
        %v301 = vld [vmem:[#allocation5 + $0x1d0] sm:$0xff]
        %v302 = vld [vmem:[#allocation5 + $0x1d8] sm:$0xff]
        %v303 = vld [vmem:[#allocation5 + $0x1e0] sm:$0xff]
        %v304 = vld [vmem:[#allocation5 + $0x1e8] sm:$0xff]
        %v305 = vld [vmem:[#allocation5 + $0x1f0] sm:$0xff]
        %v306 = vld [vmem:[#allocation5 + $0x1f8] sm:$0xff]
        %307 = vmatpush.msra.mxu0 %v273
        %308 = vmatpush.msra.mxu0 %v271
        %309 = vmatpush.msra.mxu0 %v269
        %310 = vmatpush.msra.mxu0 %v267
        %311 = vmatpush.msra.mxu0 %v265
        %312 = vmatpush.msra.mxu0 %v263
        %313 = vmatpush.msra.mxu0 %v261
        %314 = vmatpush.msra.mxu0 %v259
        %315 = vmatpush.msra.mxu0 %v257
        %316 = vmatpush.msra.mxu0 %v255
        %317 = vmatpush.msra.mxu0 %v253
        %318 = vmatpush.msra.mxu0 %v251
        %319 = vmatpush.msra.mxu0 %v249
        %320 = vmatpush.msra.mxu0 %v247
        %321 = vmatpush.msra.mxu0 %v245
        %322 = vmatpush.msra.mxu0 %v243
        %323 = vmatmul.f32.gmra.mxu0 %v227
        %v324 = vpop.f32.mrf.mxu0
        %v325 = vadd.f32 0.0, %v324
        %326 = vmatmul.f32.gmra.mxu0 %v229
        %v327 = vpop.f32.mrf.mxu0
        %v328 = vadd.f32 0.0, %v327
        %329 = vmatmul.f32.gmra.mxu0 %v231
        %v330 = vpop.f32.mrf.mxu0
        %v331 = vadd.f32 0.0, %v330
        %332 = vmatmul.f32.gmra.mxu0 %v233
        %v333 = vpop.f32.mrf.mxu0
        %v334 = vadd.f32 0.0, %v333
        %335 = vmatmul.f32.gmra.mxu0 %v235
        %v336 = vpop.f32.mrf.mxu0
        %v337 = vadd.f32 0.0, %v336
        %338 = vmatmul.f32.gmra.mxu0 %v237
        %v339 = vpop.f32.mrf.mxu0
        %v340 = vadd.f32 0.0, %v339
        %341 = vmatmul.f32.gmra.mxu0 %v239
        %v342 = vpop.f32.mrf.mxu0
        %v343 = vadd.f32 0.0, %v342
        %344 = vmatmul.f32.gmra.mxu0 %v241
        %v345 = vpop.f32.mrf.mxu0
        %v346 = vadd.f32 0.0, %v345
        %347 = vdwg.mxu0
        %348 = vmatpush.msra.mxu0 %v305
        %349 = vmatpush.msra.mxu0 %v303
        %350 = vmatpush.msra.mxu0 %v301
        %351 = vmatpush.msra.mxu0 %v299
        %352 = vmatpush.msra.mxu0 %v297
        %353 = vmatpush.msra.mxu0 %v295
        %354 = vmatpush.msra.mxu0 %v293
        %355 = vmatpush.msra.mxu0 %v291
        %356 = vmatpush.msra.mxu0 %v289
        %357 = vmatpush.msra.mxu0 %v287
        %358 = vmatpush.msra.mxu0 %v285
        %359 = vmatpush.msra.mxu0 %v283
        %360 = vmatpush.msra.mxu0 %v281
        %361 = vmatpush.msra.mxu0 %v279
        %362 = vmatpush.msra.mxu0 %v277
        %363 = vmatpush.msra.mxu0 %v275
        %364 = vmatmul.f32.gmra.mxu0 %v228
        %v365 = vpop.f32.mrf.mxu0
        %v366 = vadd.f32 %v325, %v365
        %367 = vmatmul.f32.gmra.mxu0 %v230
        %v368 = vpop.f32.mrf.mxu0
        %v369 = vadd.f32 %v328, %v368
        %370 = vmatmul.f32.gmra.mxu0 %v232
        %v371 = vpop.f32.mrf.mxu0
        %v372 = vadd.f32 %v331, %v371
        %373 = vmatmul.f32.gmra.mxu0 %v234
        %v374 = vpop.f32.mrf.mxu0
        %v375 = vadd.f32 %v334, %v374
        %376 = vmatmul.f32.gmra.mxu0 %v236
        %v377 = vpop.f32.mrf.mxu0
        %v378 = vadd.f32 %v337, %v377
        %379 = vmatmul.f32.gmra.mxu0 %v238
        %v380 = vpop.f32.mrf.mxu0
        %v381 = vadd.f32 %v340, %v380
        %382 = vmatmul.f32.gmra.mxu0 %v240
        %v383 = vpop.f32.mrf.mxu0
        %v384 = vadd.f32 %v343, %v383
        %385 = vmatmul.f32.gmra.mxu0 %v242
        %v386 = vpop.f32.mrf.mxu0
        %v387 = vadd.f32 %v346, %v386
        %388 = vdwg.mxu0
        %389 = vmatpush.msra.mxu0 %v274
        %390 = vmatpush.msra.mxu0 %v272
        %391 = vmatpush.msra.mxu0 %v270
        %392 = vmatpush.msra.mxu0 %v268
        %393 = vmatpush.msra.mxu0 %v266
        %394 = vmatpush.msra.mxu0 %v264
        %395 = vmatpush.msra.mxu0 %v262
        %396 = vmatpush.msra.mxu0 %v260
        %397 = vmatpush.msra.mxu0 %v258
        %398 = vmatpush.msra.mxu0 %v256
        %399 = vmatpush.msra.mxu0 %v254
        %400 = vmatpush.msra.mxu0 %v252
        %401 = vmatpush.msra.mxu0 %v250
        %402 = vmatpush.msra.mxu0 %v248
        %403 = vmatpush.msra.mxu0 %v246
        %404 = vmatpush.msra.mxu0 %v244
        %405 = vmatmul.f32.gmra.mxu0 %v227
        %v406 = vpop.f32.mrf.mxu0
        %v407 = vadd.f32 0.0, %v406
        %408 = vmatmul.f32.gmra.mxu0 %v229
        %v409 = vpop.f32.mrf.mxu0
        %v410 = vadd.f32 0.0, %v409
        %411 = vmatmul.f32.gmra.mxu0 %v231
        %v412 = vpop.f32.mrf.mxu0
        %v413 = vadd.f32 0.0, %v412
        %414 = vmatmul.f32.gmra.mxu0 %v233
        %v415 = vpop.f32.mrf.mxu0
        %v416 = vadd.f32 0.0, %v415
        %417 = vmatmul.f32.gmra.mxu0 %v235
        %v418 = vpop.f32.mrf.mxu0
        %v419 = vadd.f32 0.0, %v418
        %420 = vmatmul.f32.gmra.mxu0 %v237
        %v421 = vpop.f32.mrf.mxu0
        %v422 = vadd.f32 0.0, %v421
        %423 = vmatmul.f32.gmra.mxu0 %v239
        %v424 = vpop.f32.mrf.mxu0
        %v425 = vadd.f32 0.0, %v424
        %426 = vmatmul.f32.gmra.mxu0 %v241
        %v427 = vpop.f32.mrf.mxu0
        %v428 = vadd.f32 0.0, %v427
        %429 = vdwg.mxu0
        %430 = vmatpush.msra.mxu0 %v306
        %431 = vmatpush.msra.mxu0 %v304
        %432 = vmatpush.msra.mxu0 %v302
        %433 = vmatpush.msra.mxu0 %v300
        %434 = vmatpush.msra.mxu0 %v298
        %435 = vmatpush.msra.mxu0 %v296
        %436 = vmatpush.msra.mxu0 %v294
        %437 = vmatpush.msra.mxu0 %v292
        %438 = vmatpush.msra.mxu0 %v290
        %439 = vmatpush.msra.mxu0 %v288
        %440 = vmatpush.msra.mxu0 %v286
        %441 = vmatpush.msra.mxu0 %v284
        %442 = vmatpush.msra.mxu0 %v282
        %443 = vmatpush.msra.mxu0 %v280
        %444 = vmatpush.msra.mxu0 %v278
        %445 = vmatpush.msra.mxu0 %v276
        %446 = vmatmul.f32.gmra.mxu0 %v228
        %v447 = vpop.f32.mrf.mxu0
        %v448 = vadd.f32 %v407, %v447
        %449 = vmatmul.f32.gmra.mxu0 %v230
        %v450 = vpop.f32.mrf.mxu0
        %v451 = vadd.f32 %v410, %v450
        %452 = vmatmul.f32.gmra.mxu0 %v232
        %v453 = vpop.f32.mrf.mxu0
        %v454 = vadd.f32 %v413, %v453
        %455 = vmatmul.f32.gmra.mxu0 %v234
        %v456 = vpop.f32.mrf.mxu0
        %v457 = vadd.f32 %v416, %v456
        %458 = vmatmul.f32.gmra.mxu0 %v236
        %v459 = vpop.f32.mrf.mxu0
        %v460 = vadd.f32 %v419, %v459
        %461 = vmatmul.f32.gmra.mxu0 %v238
        %v462 = vpop.f32.mrf.mxu0
        %v463 = vadd.f32 %v422, %v462
        %464 = vmatmul.f32.gmra.mxu0 %v240
        %v465 = vpop.f32.mrf.mxu0
        %v466 = vadd.f32 %v425, %v465
        %467 = vmatmul.f32.gmra.mxu0 %v242
        %v468 = vpop.f32.mrf.mxu0
        %v469 = vadd.f32 %v428, %v468
        %470 = vdwg.mxu0
        %v471 = vld [vmem:[#allocation7] sm:$0xff]
        %v472 = vld [vmem:[#allocation7 + $0x8] sm:$0xff]
        %v473 = vld [vmem:[#allocation7 + $0x10] sm:$0xff]
        %v474 = vld [vmem:[#allocation7 + $0x18] sm:$0xff]
        %v475 = vld [vmem:[#allocation7 + $0x20] sm:$0xff]
        %v476 = vld [vmem:[#allocation7 + $0x28] sm:$0xff]
        %v477 = vld [vmem:[#allocation7 + $0x30] sm:$0xff]
        %v478 = vld [vmem:[#allocation7 + $0x38] sm:$0xff]
        %v479 = vld [vmem:[#allocation7 + $0x40] sm:$0xff]
        %v480 = vld [vmem:[#allocation7 + $0x48] sm:$0xff]
        %v481 = vld [vmem:[#allocation7 + $0x50] sm:$0xff]
        %v482 = vld [vmem:[#allocation7 + $0x58] sm:$0xff]
        %v483 = vld [vmem:[#allocation7 + $0x60] sm:$0xff]
        %v484 = vld [vmem:[#allocation7 + $0x68] sm:$0xff]
        %v485 = vld [vmem:[#allocation7 + $0x70] sm:$0xff]
        %v486 = vld [vmem:[#allocation7 + $0x78] sm:$0xff]
        %v487 = vld [vmem:[#allocation7 + $0x80] sm:$0xff]
        %v488 = vld [vmem:[#allocation7 + $0x88] sm:$0xff]
        %v489 = vld [vmem:[#allocation7 + $0x90] sm:$0xff]
        %v490 = vld [vmem:[#allocation7 + $0x98] sm:$0xff]
        %v491 = vld [vmem:[#allocation7 + $0xa0] sm:$0xff]
        %v492 = vld [vmem:[#allocation7 + $0xa8] sm:$0xff]
        %v493 = vld [vmem:[#allocation7 + $0xb0] sm:$0xff]
        %v494 = vld [vmem:[#allocation7 + $0xb8] sm:$0xff]
        %v495 = vld [vmem:[#allocation7 + $0xc0] sm:$0xff]
        %v496 = vld [vmem:[#allocation7 + $0xc8] sm:$0xff]
        %v497 = vld [vmem:[#allocation7 + $0xd0] sm:$0xff]
        %v498 = vld [vmem:[#allocation7 + $0xd8] sm:$0xff]
        %v499 = vld [vmem:[#allocation7 + $0xe0] sm:$0xff]
        %v500 = vld [vmem:[#allocation7 + $0xe8] sm:$0xff]
        %v501 = vld [vmem:[#allocation7 + $0xf0] sm:$0xff]
        %v502 = vld [vmem:[#allocation7 + $0xf8] sm:$0xff]
        %v503 = vld [vmem:[#allocation7 + $0x100] sm:$0xff]
        %v504 = vld [vmem:[#allocation7 + $0x108] sm:$0xff]
        %v505 = vld [vmem:[#allocation7 + $0x110] sm:$0xff]
        %v506 = vld [vmem:[#allocation7 + $0x118] sm:$0xff]
        %v507 = vld [vmem:[#allocation7 + $0x120] sm:$0xff]
        %v508 = vld [vmem:[#allocation7 + $0x128] sm:$0xff]
        %v509 = vld [vmem:[#allocation7 + $0x130] sm:$0xff]
        %v510 = vld [vmem:[#allocation7 + $0x138] sm:$0xff]
        %v511 = vld [vmem:[#allocation7 + $0x140] sm:$0xff]
        %v512 = vld [vmem:[#allocation7 + $0x148] sm:$0xff]
        %v513 = vld [vmem:[#allocation7 + $0x150] sm:$0xff]
        %v514 = vld [vmem:[#allocation7 + $0x158] sm:$0xff]
        %v515 = vld [vmem:[#allocation7 + $0x160] sm:$0xff]
        %v516 = vld [vmem:[#allocation7 + $0x168] sm:$0xff]
        %v517 = vld [vmem:[#allocation7 + $0x170] sm:$0xff]
        %v518 = vld [vmem:[#allocation7 + $0x178] sm:$0xff]
        %v519 = vld [vmem:[#allocation7 + $0x180] sm:$0xff]
        %v520 = vld [vmem:[#allocation7 + $0x188] sm:$0xff]
        %v521 = vld [vmem:[#allocation7 + $0x190] sm:$0xff]
        %v522 = vld [vmem:[#allocation7 + $0x198] sm:$0xff]
        %v523 = vld [vmem:[#allocation7 + $0x1a0] sm:$0xff]
        %v524 = vld [vmem:[#allocation7 + $0x1a8] sm:$0xff]
        %v525 = vld [vmem:[#allocation7 + $0x1b0] sm:$0xff]
        %v526 = vld [vmem:[#allocation7 + $0x1b8] sm:$0xff]
        %v527 = vld [vmem:[#allocation7 + $0x1c0] sm:$0xff]
        %v528 = vld [vmem:[#allocation7 + $0x1c8] sm:$0xff]
        %v529 = vld [vmem:[#allocation7 + $0x1d0] sm:$0xff]
        %v530 = vld [vmem:[#allocation7 + $0x1d8] sm:$0xff]
        %v531 = vld [vmem:[#allocation7 + $0x1e0] sm:$0xff]
        %v532 = vld [vmem:[#allocation7 + $0x1e8] sm:$0xff]
        %v533 = vld [vmem:[#allocation7 + $0x1f0] sm:$0xff]
        %v534 = vld [vmem:[#allocation7 + $0x1f8] sm:$0xff]
        %535 = vmatpush.msra.mxu0 %v501
        %536 = vmatpush.msra.mxu0 %v499
        %537 = vmatpush.msra.mxu0 %v497
        %538 = vmatpush.msra.mxu0 %v495
        %539 = vmatpush.msra.mxu0 %v493
        %540 = vmatpush.msra.mxu0 %v491
        %541 = vmatpush.msra.mxu0 %v489
        %542 = vmatpush.msra.mxu0 %v487
        %543 = vmatpush.msra.mxu0 %v485
        %544 = vmatpush.msra.mxu0 %v483
        %545 = vmatpush.msra.mxu0 %v481
        %546 = vmatpush.msra.mxu0 %v479
        %547 = vmatpush.msra.mxu0 %v477
        %548 = vmatpush.msra.mxu0 %v475
        %549 = vmatpush.msra.mxu0 %v473
        %550 = vmatpush.msra.mxu0 %v471
        %551 = vmatmul.f32.gmra.mxu0 %v366
        %v552 = vpop.f32.mrf.mxu0
        %v553 = vadd.f32 0.0, %v552
        %554 = vmatmul.f32.gmra.mxu0 %v369
        %v555 = vpop.f32.mrf.mxu0
        %v556 = vadd.f32 0.0, %v555
        %557 = vmatmul.f32.gmra.mxu0 %v372
        %v558 = vpop.f32.mrf.mxu0
        %v559 = vadd.f32 0.0, %v558
        %560 = vmatmul.f32.gmra.mxu0 %v375
        %v561 = vpop.f32.mrf.mxu0
        %v562 = vadd.f32 0.0, %v561
        %563 = vmatmul.f32.gmra.mxu0 %v378
        %v564 = vpop.f32.mrf.mxu0
        %v565 = vadd.f32 0.0, %v564
        %566 = vmatmul.f32.gmra.mxu0 %v381
        %v567 = vpop.f32.mrf.mxu0
        %v568 = vadd.f32 0.0, %v567
        %569 = vmatmul.f32.gmra.mxu0 %v384
        %v570 = vpop.f32.mrf.mxu0
        %v571 = vadd.f32 0.0, %v570
        %572 = vmatmul.f32.gmra.mxu0 %v387
        %v573 = vpop.f32.mrf.mxu0
        %v574 = vadd.f32 0.0, %v573
        %575 = vdwg.mxu0
        %576 = vmatpush.msra.mxu0 %v533
        %577 = vmatpush.msra.mxu0 %v531
        %578 = vmatpush.msra.mxu0 %v529
        %579 = vmatpush.msra.mxu0 %v527
        %580 = vmatpush.msra.mxu0 %v525
        %581 = vmatpush.msra.mxu0 %v523
        %582 = vmatpush.msra.mxu0 %v521
        %583 = vmatpush.msra.mxu0 %v519
        %584 = vmatpush.msra.mxu0 %v517
        %585 = vmatpush.msra.mxu0 %v515
        %586 = vmatpush.msra.mxu0 %v513
        %587 = vmatpush.msra.mxu0 %v511
        %588 = vmatpush.msra.mxu0 %v509
        %589 = vmatpush.msra.mxu0 %v507
        %590 = vmatpush.msra.mxu0 %v505
        %591 = vmatpush.msra.mxu0 %v503
        %592 = vmatmul.f32.gmra.mxu0 %v448
        %v593 = vpop.f32.mrf.mxu0
        %v594 = vadd.f32 %v553, %v593
        %595 = vmatmul.f32.gmra.mxu0 %v451
        %v596 = vpop.f32.mrf.mxu0
        %v597 = vadd.f32 %v556, %v596
        %598 = vmatmul.f32.gmra.mxu0 %v454
        %v599 = vpop.f32.mrf.mxu0
        %v600 = vadd.f32 %v559, %v599
        %601 = vmatmul.f32.gmra.mxu0 %v457
        %v602 = vpop.f32.mrf.mxu0
        %v603 = vadd.f32 %v562, %v602
        %604 = vmatmul.f32.gmra.mxu0 %v460
        %v605 = vpop.f32.mrf.mxu0
        %v606 = vadd.f32 %v565, %v605
        %607 = vmatmul.f32.gmra.mxu0 %v463
        %v608 = vpop.f32.mrf.mxu0
        %v609 = vadd.f32 %v568, %v608
        %610 = vmatmul.f32.gmra.mxu0 %v466
        %v611 = vpop.f32.mrf.mxu0
        %v612 = vadd.f32 %v571, %v611
        %613 = vmatmul.f32.gmra.mxu0 %v469
        %v614 = vpop.f32.mrf.mxu0
        %v615 = vadd.f32 %v574, %v614
        %616 = vdwg.mxu0
        %617 = vmatpush.msra.mxu0 %v502
        %618 = vmatpush.msra.mxu0 %v500
        %619 = vmatpush.msra.mxu0 %v498
        %620 = vmatpush.msra.mxu0 %v496
        %621 = vmatpush.msra.mxu0 %v494
        %622 = vmatpush.msra.mxu0 %v492
        %623 = vmatpush.msra.mxu0 %v490
        %624 = vmatpush.msra.mxu0 %v488
        %625 = vmatpush.msra.mxu0 %v486
        %626 = vmatpush.msra.mxu0 %v484
        %627 = vmatpush.msra.mxu0 %v482
        %628 = vmatpush.msra.mxu0 %v480
        %629 = vmatpush.msra.mxu0 %v478
        %630 = vmatpush.msra.mxu0 %v476
        %631 = vmatpush.msra.mxu0 %v474
        %632 = vmatpush.msra.mxu0 %v472
        %633 = vmatmul.f32.gmra.mxu0 %v366
        %v634 = vpop.f32.mrf.mxu0
        %v635 = vadd.f32 0.0, %v634
        %636 = vmatmul.f32.gmra.mxu0 %v369
        %v637 = vpop.f32.mrf.mxu0
        %v638 = vadd.f32 0.0, %v637
        %639 = vmatmul.f32.gmra.mxu0 %v372
        %v640 = vpop.f32.mrf.mxu0
        %v641 = vadd.f32 0.0, %v640
        %642 = vmatmul.f32.gmra.mxu0 %v375
        %v643 = vpop.f32.mrf.mxu0
        %v644 = vadd.f32 0.0, %v643
        %645 = vmatmul.f32.gmra.mxu0 %v378
        %v646 = vpop.f32.mrf.mxu0
        %v647 = vadd.f32 0.0, %v646
        %648 = vmatmul.f32.gmra.mxu0 %v381
        %v649 = vpop.f32.mrf.mxu0
        %v650 = vadd.f32 0.0, %v649
        %651 = vmatmul.f32.gmra.mxu0 %v384
        %v652 = vpop.f32.mrf.mxu0
        %v653 = vadd.f32 0.0, %v652
        %654 = vmatmul.f32.gmra.mxu0 %v387
        %v655 = vpop.f32.mrf.mxu0
        %v656 = vadd.f32 0.0, %v655
        %657 = vdwg.mxu0
        %658 = vmatpush.msra.mxu0 %v534
        %659 = vmatpush.msra.mxu0 %v532
        %660 = vmatpush.msra.mxu0 %v530
        %661 = vmatpush.msra.mxu0 %v528
        %662 = vmatpush.msra.mxu0 %v526
        %663 = vmatpush.msra.mxu0 %v524
        %664 = vmatpush.msra.mxu0 %v522
        %665 = vmatpush.msra.mxu0 %v520
        %666 = vmatpush.msra.mxu0 %v518
        %667 = vmatpush.msra.mxu0 %v516
        %668 = vmatpush.msra.mxu0 %v514
        %669 = vmatpush.msra.mxu0 %v512
        %670 = vmatpush.msra.mxu0 %v510
        %671 = vmatpush.msra.mxu0 %v508
        %672 = vmatpush.msra.mxu0 %v506
        %673 = vmatpush.msra.mxu0 %v504
        %674 = vmatmul.f32.gmra.mxu0 %v448
        %v675 = vpop.f32.mrf.mxu0
        %v676 = vadd.f32 %v635, %v675
        %677 = vmatmul.f32.gmra.mxu0 %v451
        %v678 = vpop.f32.mrf.mxu0
        %v679 = vadd.f32 %v638, %v678
        %680 = vmatmul.f32.gmra.mxu0 %v454
        %v681 = vpop.f32.mrf.mxu0
        %v682 = vadd.f32 %v641, %v681
        %683 = vmatmul.f32.gmra.mxu0 %v457
        %v684 = vpop.f32.mrf.mxu0
        %v685 = vadd.f32 %v644, %v684
        %686 = vmatmul.f32.gmra.mxu0 %v460
        %v687 = vpop.f32.mrf.mxu0
        %v688 = vadd.f32 %v647, %v687
        %689 = vmatmul.f32.gmra.mxu0 %v463
        %v690 = vpop.f32.mrf.mxu0
        %v691 = vadd.f32 %v650, %v690
        %692 = vmatmul.f32.gmra.mxu0 %v466
        %v693 = vpop.f32.mrf.mxu0
        %v694 = vadd.f32 %v653, %v693
        %695 = vmatmul.f32.gmra.mxu0 %v469
        %v696 = vpop.f32.mrf.mxu0
        %v697 = vadd.f32 %v656, %v696
        %698 = vdwg.mxu0
        %699 = vst [vmem:[%s224] sm:$0xff] %v594
        %700 = vst [vmem:[%s224 + $0x8] sm:$0xff] %v676
        %701 = vst [vmem:[%s224 + $0x10] sm:$0xff] %v597
        %702 = vst [vmem:[%s224 + $0x18] sm:$0xff] %v679
        %703 = vst [vmem:[%s224 + $0x20] sm:$0xff] %v600
        %704 = vst [vmem:[%s224 + $0x28] sm:$0xff] %v682
        %705 = vst [vmem:[%s224 + $0x30] sm:$0xff] %v603
        %706 = vst [vmem:[%s224 + $0x38] sm:$0xff] %v685
        %707 = vst [vmem:[%s224 + $0x40] sm:$0xff] %v606
        %708 = vst [vmem:[%s224 + $0x48] sm:$0xff] %v688
        %709 = vst [vmem:[%s224 + $0x50] sm:$0xff] %v609
        %710 = vst [vmem:[%s224 + $0x58] sm:$0xff] %v691
        %711 = vst [vmem:[%s224 + $0x60] sm:$0xff] %v612
        %712 = vst [vmem:[%s224 + $0x68] sm:$0xff] %v694
        %713 = vst [vmem:[%s224 + $0x70] sm:$0xff] %v615
        %714 = vst [vmem:[%s224 + $0x78] sm:$0xff] %v697
        %s715 = sand.u32 %s97, 1
        %s716 = scalar_lea.sflag [#allocation4], %s715
        %s717 = sand.u32 %s97, 1
        %s718 = smul.addr %s717, 128
        %s719 = scalar_lea.vmem [#allocation8], %s718
        // Predicated region
        $region45: #{tpu_custom_call.1} parent=31 // pred_check
          %p720 = pneg %p107
        $region46: #{tpu_custom_call.1} parent=31 // pred_check_branch
          %722 = sbr.rel (%p720) target = $region48
        $region47: #{tpu_custom_call.1} parent=31 // pred_region
          %s723 = smul.u32 8, %s21
          %725 = vsyncadd %s716, 0
          %s726 = smul.addr %s723, 2
          %s727 = smul.addr %s726, 8
          %s728 = scalar_lea.hbm %s3, %s727
          %s729 = sshll.u32 %s719, 4
          %s730 = int_to_ptr.vmem [resolvable:$true] %s729
          %s731 = sshll.u32 %s728, 4
          %s732 = int_to_ptr.hbm [resolvable:$true] %s731
          %737 = dma.vmem_to_hbm [thread:$0]  %s730, 2048, %s732, %s716, 256, 256, 16
        $region48: #{tpu_custom_call.1} parent=31 // pred_fallthru
          _
      $region32: #{tpu_custom_call.1} parent=5 // pred_fallthru
        _
      %p738 = scmp.le.s32.totalorder 2, %s16
      // Predicated region
      $region49: #{tpu_custom_call.1} parent=5 // pred_check
        %p739 = pneg %p738
      $region50: #{tpu_custom_call.1} parent=5 // pred_check_branch
        %741 = sbr.rel (%p739) target = $region52
      $region51: #{tpu_custom_call.1} parent=5 // pred_region
        %s742 = ssub.s32 %s16, 2
        // Predicated region
        $region53: #{tpu_custom_call.1} parent=51 // pred_check
          %p743 = pneg %p113
        $region54: #{tpu_custom_call.1} parent=51 // pred_check_branch
          %745 = sbr.rel (%p743) target = $region56
        $region55: #{tpu_custom_call.1} parent=51 // pred_region
          %s746 = sand.u32 %s98, 1
          %s747 = scalar_lea.sflag [#allocation4], %s746
          %s748 = sand.u32 %s98, 1
          %s749 = smul.addr %s748, 128
          %s750 = scalar_lea.vmem [#allocation8], %s749
          %752 = dma.done %s747, 2048
        $region56: #{tpu_custom_call.1} parent=51 // pred_fallthru
          _
      $region52: #{tpu_custom_call.1} parent=5 // pred_fallthru
        _
    $region6: #{tpu_custom_call.1} parent=1 // loop_footer
      %s20 = sadd.s32 1, %s16
    $region7: #{tpu_custom_call.1} parent=1 // loop_footer_branch
      %15 = sbr.rel target = $region3
    $region8: #{tpu_custom_call.1} parent=1 // loop_exit
      _
    %753 = vsyncpa [#allocation3], 1
    %s754 = scalar_lea.sflag [#allocation3], 1
    %755 = vsyncpa %s754, 1
    %756 = vsyncpa [#allocation6], 1
    %757 = vsyncpa [#allocation4], 1
    %s758 = scalar_lea.sflag [#allocation4], 1
    %759 = vsyncpa %s758, 1

</llo_original>
